<compile_context>
chip_gen: v6e
topology: v6e:2x2x1
jax: 0.10.0
libtpu: 0.0.40
codegen_flags: <defaults>
</compile_context>

<pallas_src>
import functools

import jax
import jax.numpy as jnp
from jax.experimental import pallas as pl
from jax.experimental.pallas import tpu as pltpu

LANE = 128
_VMEM_LIMIT = 48 * 1024 * 1024  # > 16/32 MiB scoped defaults, < v7x 64 MiB physical


def _round_up(x, m):
    return (x + m - 1) // m * m


def _choose_tile(m, target=512):
    # Biggest row tile up to `target`; if m is small the block equals the full
    # (row-padded) extent, which always satisfies the (8,128) block rules.
    return min(target, _round_up(m, 8))


def _pad_axis(a, axis, new_size):
    pad = [(0, 0)] * a.ndim
    pad[axis] = (0, new_size - a.shape[axis])
    return jnp.pad(a, pad)


# ----------------------------------------------------------------------------
# Kernel 1: im2col-conv as matmul with fused BN scale/bias + ReLU epilogue.
# ----------------------------------------------------------------------------
def _conv_mm_bn_relu_kernel(p_ref, w_ref, s_ref, b_ref, o_ref):
    acc = jnp.dot(p_ref[...], w_ref[...], preferred_element_type=jnp.float32)
    y = jnp.maximum(acc * s_ref[...] + b_ref[...], 0.0)
    o_ref[...] = y.astype(o_ref.dtype)


def conv_matmul_bn_relu(patches, w, scale, bias, *, tm=512):
    """patches (M, K) bf16, w (K, Npad) bf16, scale/bias (Npad,) f32 -> (M, Npad) bf16."""
    M, K = patches.shape
    N = w.shape[1]
    tm = _choose_tile(M, tm)
    m_pad = _round_up(M, tm)
    if m_pad != M:
        patches = jnp.pad(patches, ((0, m_pad - M), (0, 0)))
    out = pl.pallas_call(
        _conv_mm_bn_relu_kernel,
        out_shape=jax.ShapeDtypeStruct((m_pad, N), jnp.bfloat16),
        grid=(m_pad // tm,),
        in_specs=[
            pl.BlockSpec((tm, K), lambda i: (i, 0)),
            pl.BlockSpec((K, N), lambda i: (0, 0)),   # resident weight
            pl.BlockSpec((1, N), lambda i: (0, 0)),   # resident BN scale
            pl.BlockSpec((1, N), lambda i: (0, 0)),   # resident BN bias
        ],
        out_specs=pl.BlockSpec((tm, N), lambda i: (i, 0)),
        compiler_params=pltpu.CompilerParams(
            dimension_semantics=("parallel",),
            vmem_limit_bytes=_VMEM_LIMIT),
    )(patches, w, scale.reshape(1, N), bias.reshape(1, N))
    return out[:M]


# ----------------------------------------------------------------------------
# Kernel 2: conv-as-matmul + BN + ReLU fused with global-average-pool + head.
# The (B, HW, C2) feature map never goes to HBM; only (B, num_classes_pad)
# logits are stored.
# ----------------------------------------------------------------------------
def _conv_bn_relu_gap_head_kernel(p_ref, w_ref, s_ref, b_ref, wh_ref, bh_ref,
                                  o_ref, acc_ref, *, tm, hw_valid, needs_mask):
    m = pl.program_id(1)

    @pl.when(m == 0)
    def _():
        acc_ref[...] = jnp.zeros_like(acc_ref)

    y = jnp.dot(p_ref[0], w_ref[...], preferred_element_type=jnp.float32)
    y = jnp.maximum(y * s_ref[...] + b_ref[...], 0.0)
    if needs_mask:  # zero out rows that are only M-padding (would add relu(bias))
        row = jax.lax.broadcasted_iota(jnp.int32, y.shape, 0) + m * tm
        y = jnp.where(row < hw_valid, y, 0.0)
    acc_ref[...] += jnp.sum(y, axis=0, keepdims=True)

    @pl.when(m == pl.num_programs(1) - 1)
    def _():
        pooled = acc_ref[...] * (1.0 / hw_valid)                   # (1, C2pad)
        logits = jnp.dot(pooled.astype(jnp.bfloat16), wh_ref[...],
                         preferred_element_type=jnp.float32) + bh_ref[...]
        o_ref[0] = logits.astype(o_ref.dtype)


def conv_bn_relu_gap_head(patches, w, scale, bias, w_head, b_head, *, tm=512):
    """patches (B, HW, K) bf16 -> logits (B, 1, NCLS_PAD) f32 (fused conv+GAP+head)."""
    B, HW, K = patches.shape
    C = w.shape[1]
    NCLS = w_head.shape[1]
    tm = _choose_tile(HW, tm)
    hw_pad = _round_up(HW, tm)
    if hw_pad != HW:
        patches = jnp.pad(patches, ((0, 0), (0, hw_pad - HW), (0, 0)))
    kern = functools.partial(_conv_bn_relu_gap_head_kernel,
                             tm=tm, hw_valid=HW, needs_mask=(hw_pad != HW))
    return pl.pallas_call(
        kern,
        out_shape=jax.ShapeDtypeStruct((B, 1, NCLS), jnp.float32),
        grid=(B, hw_pad // tm),
        in_specs=[
            pl.BlockSpec((1, tm, K), lambda b, m: (b, m, 0)),
            pl.BlockSpec((K, C), lambda b, m: (0, 0)),     # resident conv weight
            pl.BlockSpec((1, C), lambda b, m: (0, 0)),     # resident BN scale
            pl.BlockSpec((1, C), lambda b, m: (0, 0)),     # resident BN bias
            pl.BlockSpec((C, NCLS), lambda b, m: (0, 0)),  # resident head weight
            pl.BlockSpec((1, NCLS), lambda b, m: (0, 0)),  # resident head bias
        ],
        out_specs=pl.BlockSpec((1, 1, NCLS), lambda b, m: (b, 0, 0)),
        scratch_shapes=[pltpu.VMEM((1, C), jnp.float32)],  # per-image pooled sum
        compiler_params=pltpu.CompilerParams(
            dimension_semantics=("parallel", "arbitrary"),
            vmem_limit_bytes=_VMEM_LIMIT),
    )(patches, w, scale.reshape(1, C), bias.reshape(1, C),
      w_head, b_head.reshape(1, NCLS))


# ----------------------------------------------------------------------------
# JAX glue: im2col (conv lowering), BN folding, parameter setup, forward.
# ----------------------------------------------------------------------------
def im2col(x_nhwc, ksize=3, stride=1, pad=1):
    """(dh, dw, cin)-ordered patches. Returns (B*Ho*Wo, k*k*Cin), Ho, Wo."""
    B, H, W, C = x_nhwc.shape
    xp = jnp.pad(x_nhwc, ((0, 0), (pad, pad), (pad, pad), (0, 0)))
    Ho = (H + 2 * pad - ksize) // stride + 1
    Wo = (W + 2 * pad - ksize) // stride + 1
    cols = []
    for dh in range(ksize):
        for dw in range(ksize):
            cols.append(
                xp[:, dh:dh + Ho * stride:stride, dw:dw + Wo * stride:stride, :])
    patches = jnp.stack(cols, axis=3)                     # (B, Ho, Wo, k*k, Cin)
    return patches.reshape(B * Ho * Wo, ksize * ksize * C), Ho, Wo


def conv_weight_to_matmul(w_oihw):
    """torch conv weight (Cout, Cin, kh, kw) -> im2col weight (kh*kw*Cin, Cout)."""
    cout, cin, kh, kw = w_oihw.shape
    return jnp.transpose(w_oihw, (2, 3, 1, 0)).reshape(kh * kw * cin, cout)


def fold_bn(gamma, beta, mean, var, conv_bias, eps=1e-5):
    scale = gamma / jnp.sqrt(var + eps)
    bias = beta - mean * scale + conv_bias * scale
    return scale, bias


def init_params(key, in_chans, c1, c2, num_classes):
    ks = jax.random.split(key, 8)
    p = {}
    p["w_stem"] = 0.1 * jax.random.normal(ks[0], (c1, in_chans, 3, 3), jnp.float32)
    p["b_stem"] = 0.01 * jax.random.normal(ks[1], (c1,), jnp.float32)
    p["bn1_g"] = 1.0 + 0.05 * jax.random.normal(ks[2], (c1,), jnp.float32)
    p["bn1_b"] = 0.05 * jax.random.normal(ks[3], (c1,), jnp.float32)
    p["bn1_m"] = jnp.zeros((c1,), jnp.float32)
    p["bn1_v"] = jnp.ones((c1,), jnp.float32)
    p["w_blk"] = 0.1 * jax.random.normal(ks[4], (c2, c1, 3, 3), jnp.float32)
    p["b_blk"] = 0.01 * jax.random.normal(ks[5], (c2,), jnp.float32)
    p["bn2_g"] = 1.0 + 0.05 * jax.random.normal(ks[6], (c2,), jnp.float32)
    p["bn2_b"] = 0.05 * jax.random.normal(ks[7], (c2,), jnp.float32)
    p["bn2_m"] = jnp.zeros((c2,), jnp.float32)
    p["bn2_v"] = jnp.ones((c2,), jnp.float32)
    kh, kb = jax.random.split(jax.random.fold_in(key, 123))
    p["w_head"] = 0.05 * jax.random.normal(kh, (c2, num_classes), jnp.float32)
    p["b_head"] = 0.01 * jax.random.normal(kb, (num_classes,), jnp.float32)
    return p


def birdclef23_forward(x_nchw, params):
    """Inference forward: x (B, in_chans, H, W) NCHW -> logits (B, num_classes)."""
    B = x_nchw.shape[0]
    x = jnp.transpose(x_nchw, (0, 2, 3, 1)).astype(jnp.float32)  # NHWC

    # ---- Stem: conv3x3 stride 2 + BN + ReLU (Pallas, M-tiled parallel grid) ----
    c1 = params["w_stem"].shape[0]
    c1_pad = _round_up(c1, LANE)
    patches, Ho, Wo = im2col(x, ksize=3, stride=2, pad=1)        # (B*Ho*Wo, 9*Cin)
    w1 = _pad_axis(conv_weight_to_matmul(params["w_stem"]), 1, c1_pad)
    s1, b1 = fold_bn(params["bn1_g"], params["bn1_b"], params["bn1_m"],
                     params["bn1_v"], params["b_stem"])
    s1 = _pad_axis(s1, 0, c1_pad)
    b1 = _pad_axis(b1, 0, c1_pad)
    y1 = conv_matmul_bn_relu(patches.astype(jnp.bfloat16),
                             w1.astype(jnp.bfloat16), s1, b1)    # (M1, c1_pad) bf16
    # Drop lane padding before building the next im2col so K2 stays 9*C1.
    feats1 = y1.reshape(B, Ho, Wo, c1_pad)[..., :c1]

    # ---- Block conv3x3 stride 1 + BN + ReLU fused with GAP + classifier head ----
    c2 = params["w_blk"].shape[0]
    c2_pad = _round_up(c2, LANE)
    ncls = params["w_head"].shape[1]
    ncls_pad = _round_up(ncls, LANE)
    patches2, Ho2, Wo2 = im2col(feats1, ksize=3, stride=1, pad=1)  # bf16
    patches2 = patches2.reshape(B, Ho2 * Wo2, -1)
    w2 = _pad_axis(conv_weight_to_matmul(params["w_blk"]), 1, c2_pad)
    s2, b2 = fold_bn(params["bn2_g"], params["bn2_b"], params["bn2_m"],
                     params["bn2_v"], params["b_blk"])
    s2 = _pad_axis(s2, 0, c2_pad)
    b2 = _pad_axis(b2, 0, c2_pad)
    w_head = _pad_axis(_pad_axis(params["w_head"], 0, c2_pad), 1, ncls_pad)
    b_head = _pad_axis(params["b_head"], 0, ncls_pad)

    logits_pad = conv_bn_relu_gap_head(patches2, w2.astype(jnp.bfloat16),
                                       s2, b2,
                                       w_head.astype(jnp.bfloat16), b_head)
    return logits_pad[:, 0, :ncls]


if __name__ == "__main__":
    # Small shapes consistent with the module: mel-spectrogram style input.
    B, IN_CHANS, H, W = 2, 1, 16, 16       # (batch, in_chans, n_mels, time)
    C1, C2 = 16, 32                        # backbone widths
    NUM_CLASSES = 264                      # BirdCLEF-2023 class count

    key = jax.random.PRNGKey(0)
    kx, kp = jax.random.split(key)
    x = jax.random.normal(kx, (B, IN_CHANS, H, W), jnp.float32)
    params = init_params(kp, IN_CHANS, C1, C2, NUM_CLASSES)

    fwd = jax.jit(birdclef23_forward)
    logits = fwd(x, params)
    logits = jax.block_until_ready(logits)
    assert logits.shape == (B, NUM_CLASSES), logits.shape
    assert logits.dtype == jnp.float32
    print("KERNEL_OK")
</pallas_src>

<mosaic_0001>
module attributes {stable_mosaic.version = 11 : i64} {
  func.func @_conv_mm_bn_relu_kernel(%arg0: i32, %arg1: memref<128x9xbf16, #tpu.memory_space<vmem>>, %arg2: memref<9x128xbf16, #tpu.memory_space<vmem>>, %arg3: memref<1x128xf32, #tpu.memory_space<vmem>>, %arg4: memref<1x128xf32, #tpu.memory_space<vmem>>, %arg5: memref<128x128xbf16, #tpu.memory_space<vmem>>) attributes {dimension_semantics = [#tpu.dimension_semantics<parallel>], iteration_bounds = array<i64: 1>, scalar_prefetch = 0 : i64, scratch_operands = 0 : i64, tpu.core_type = #tpu.core_type<tc>, window_params = [{transform_indices = @transform_0, window_bounds = array<i64: 128, 9>}, {pipeline_mode = #tpu.pipeline_mode<synchronous>, transform_indices = @transform_1, window_bounds = array<i64: 9, 128>}, {pipeline_mode = #tpu.pipeline_mode<synchronous>, transform_indices = @transform_2, window_bounds = array<i64: 1, 128>}, {pipeline_mode = #tpu.pipeline_mode<synchronous>, transform_indices = @transform_3, window_bounds = array<i64: 1, 128>}, {transform_indices = @transform_4, window_bounds = array<i64: 128, 128>}]} {
    %c0 = arith.constant 0 : index
    %c0_0 = arith.constant 0 : index
    %0 = vector.load %arg1[%c0, %c0_0] : memref<128x9xbf16, #tpu.memory_space<vmem>>, vector<128x9xbf16>
    %c0_1 = arith.constant 0 : index
    %c0_2 = arith.constant 0 : index
    %1 = vector.load %arg2[%c0_1, %c0_2] : memref<9x128xbf16, #tpu.memory_space<vmem>>, vector<9x128xbf16>
    %cst = arith.constant dense<0.000000e+00> : vector<128x128xf32>
    %2 = tpu.matmul %0, %1, %cst {dimension_numbers = #tpu.dot_dimension_numbers<[1], [0], [0], [1], [0, 0, 1, 1], [], []>} : vector<128x9xbf16>, vector<9x128xbf16>, vector<128x128xf32> -> vector<128x128xf32>
    %c0_3 = arith.constant 0 : index
    %c0_4 = arith.constant 0 : index
    %3 = vector.load %arg3[%c0_3, %c0_4] : memref<1x128xf32, #tpu.memory_space<vmem>>, vector<1x128xf32>
    %4 = vector.broadcast %3 : vector<1x128xf32> to vector<128x128xf32>
    %5 = arith.mulf %2, %4 : vector<128x128xf32>
    %c0_5 = arith.constant 0 : index
    %c0_6 = arith.constant 0 : index
    %6 = vector.load %arg4[%c0_5, %c0_6] : memref<1x128xf32, #tpu.memory_space<vmem>>, vector<1x128xf32>
    %7 = vector.broadcast %6 : vector<1x128xf32> to vector<128x128xf32>
    %8 = arith.addf %5, %7 : vector<128x128xf32>
    %cst_7 = arith.constant 0.000000e+00 : f32
    %9 = vector.broadcast %cst_7 : f32 to vector<128x128xf32>
    %10 = arith.maximumf %8, %9 : vector<128x128xf32>
    %11 = arith.truncf %10 : vector<128x128xf32> to vector<128x128xbf16>
    %c0_8 = arith.constant 0 : index
    %c0_9 = arith.constant 0 : index
    %12 = vector.load %arg5[%c0_8, %c0_9] : memref<128x128xbf16, #tpu.memory_space<vmem>>, vector<128x128xbf16>
    tpu.vector_store %arg5[%c0_8, %c0_9], %11 {strides = array<i32>} : memref<128x128xbf16, #tpu.memory_space<vmem>>, vector<128x128xbf16>,
    return
  }
  func.func @transform_0(%arg0: i32) -> (i32, i32) {
    %c0_i32 = arith.constant 0 : i32
    %c0_i32_0 = arith.constant 0 : i32
    return %arg0, %c0_i32 : i32, i32
  }
  func.func @transform_1(%arg0: i32) -> (i32, i32) {
    %c0_i32 = arith.constant 0 : i32
    %c0_i32_0 = arith.constant 0 : i32
    %c0_i32_1 = arith.constant 0 : i32
    return %c0_i32, %c0_i32_0 : i32, i32
  }
  func.func @transform_2(%arg0: i32) -> (i32, i32) {
    %c0_i32 = arith.constant 0 : i32
    %c0_i32_0 = arith.constant 0 : i32
    %c0_i32_1 = arith.constant 0 : i32
    return %c0_i32, %c0_i32_0 : i32, i32
  }
  func.func @transform_3(%arg0: i32) -> (i32, i32) {
    %c0_i32 = arith.constant 0 : i32
    %c0_i32_0 = arith.constant 0 : i32
    %c0_i32_1 = arith.constant 0 : i32
    return %c0_i32, %c0_i32_0 : i32, i32
  }
  func.func @transform_4(%arg0: i32) -> (i32, i32) {
    %c0_i32 = arith.constant 0 : i32
    %c0_i32_0 = arith.constant 0 : i32
    return %arg0, %c0_i32 : i32, i32
  }
}

module attributes {stable_mosaic.version = 11 : i64} {
  func.func @_conv_bn_relu_gap_head_kernel(%arg0: i32, %arg1: i32, %arg2: memref<1x64x144xbf16, #tpu.memory_space<vmem>>, %arg3: memref<144x128xbf16, #tpu.memory_space<vmem>>, %arg4: memref<1x128xf32, #tpu.memory_space<vmem>>, %arg5: memref<1x128xf32, #tpu.memory_space<vmem>>, %arg6: memref<128x384xbf16, #tpu.memory_space<vmem>>, %arg7: memref<1x384xf32, #tpu.memory_space<vmem>>, %arg8: memref<1x1x384xf32, #tpu.memory_space<vmem>>, %arg9: memref<1x128xf32, #tpu.memory_space<vmem>>) attributes {dimension_semantics = [#tpu.dimension_semantics<parallel>, #tpu.dimension_semantics<arbitrary>], iteration_bounds = array<i64: 2, 1>, scalar_prefetch = 0 : i64, scratch_operands = 1 : i64, tpu.core_type = #tpu.core_type<tc>, window_params = [{transform_indices = @transform_0, window_bounds = array<i64: 1, 64, 144>}, {pipeline_mode = #tpu.pipeline_mode<synchronous>, transform_indices = @transform_1, window_bounds = array<i64: 144, 128>}, {pipeline_mode = #tpu.pipeline_mode<synchronous>, transform_indices = @transform_2, window_bounds = array<i64: 1, 128>}, {pipeline_mode = #tpu.pipeline_mode<synchronous>, transform_indices = @transform_3, window_bounds = array<i64: 1, 128>}, {pipeline_mode = #tpu.pipeline_mode<synchronous>, transform_indices = @transform_4, window_bounds = array<i64: 128, 384>}, {pipeline_mode = #tpu.pipeline_mode<synchronous>, transform_indices = @transform_5, window_bounds = array<i64: 1, 384>}, {transform_indices = @transform_6, window_bounds = array<i64: 1, 1, 384>}]} {
    %c0_i32 = arith.constant 0 : i32
    %0 = arith.cmpi eq, %arg1, %c0_i32 : i32
    %1 = arith.extui %0 : i1 to i32
    %c0_i32_0 = arith.constant 0 : i32
    %2 = arith.cmpi ne, %1, %c0_i32_0 : i32
    scf.if %2 {
      %cst_17 = arith.constant 0.000000e+00 : f32
      %23 = vector.broadcast %cst_17 : f32 to vector<1x128xf32>
      %c0_18 = arith.constant 0 : index
      %c0_19 = arith.constant 0 : index
      %24 = vector.load %arg9[%c0_18, %c0_19] : memref<1x128xf32, #tpu.memory_space<vmem>>, vector<1x128xf32>
      tpu.vector_store %arg9[%c0_18, %c0_19], %23 {strides = array<i32>} : memref<1x128xf32, #tpu.memory_space<vmem>>, vector<1x128xf32>,
    } else {
    }
    %c0 = arith.constant 0 : index
    %c0_1 = arith.constant 0 : index
    %c0_2 = arith.constant 0 : index
    %3 = vector.load %arg2[%c0, %c0_1, %c0_2] : memref<1x64x144xbf16, #tpu.memory_space<vmem>>, vector<1x64x144xbf16>
    %4 = vector.shape_cast %3 : vector<1x64x144xbf16> to vector<64x144xbf16>
    %c0_3 = arith.constant 0 : index
    %c0_4 = arith.constant 0 : index
    %5 = vector.load %arg3[%c0_3, %c0_4] : memref<144x128xbf16, #tpu.memory_space<vmem>>, vector<144x128xbf16>
    %cst = arith.constant dense<0.000000e+00> : vector<64x128xf32>
    %6 = tpu.matmul %4, %5, %cst {dimension_numbers = #tpu.dot_dimension_numbers<[1], [0], [0], [1], [0, 0, 1, 1], [], []>} : vector<64x144xbf16>, vector<144x128xbf16>, vector<64x128xf32> -> vector<64x128xf32>
    %c0_5 = arith.constant 0 : index
    %c0_6 = arith.constant 0 : index
    %7 = vector.load %arg4[%c0_5, %c0_6] : memref<1x128xf32, #tpu.memory_space<vmem>>, vector<1x128xf32>
    %8 = vector.broadcast %7 : vector<1x128xf32> to vector<64x128xf32>
    %9 = arith.mulf %6, %8 : vector<64x128xf32>
    %c0_7 = arith.constant 0 : index
    %c0_8 = arith.constant 0 : index
    %10 = vector.load %arg5[%c0_7, %c0_8] : memref<1x128xf32, #tpu.memory_space<vmem>>, vector<1x128xf32>
    %11 = vector.broadcast %10 : vector<1x128xf32> to vector<64x128xf32>
    %12 = arith.addf %9, %11 : vector<64x128xf32>
    %cst_9 = arith.constant 0.000000e+00 : f32
    %13 = vector.broadcast %cst_9 : f32 to vector<64x128xf32>
    %14 = arith.maximumf %12, %13 : vector<64x128xf32>
    %c0_10 = arith.constant 0 : index
    %c0_11 = arith.constant 0 : index
    %15 = vector.load %arg9[%c0_10, %c0_11] : memref<1x128xf32, #tpu.memory_space<vmem>>, vector<1x128xf32>
    %cst_12 = arith.constant dense<0.000000e+00> : vector<128xf32>
    %16 = vector.multi_reduction <add>, %14, %cst_12 [0] : vector<64x128xf32> to vector<128xf32>
    %17 = vector.shape_cast %16 : vector<128xf32> to vector<1x128xf32>
    %18 = arith.addf %15, %17 : vector<1x128xf32>
    %c0_13 = arith.constant 0 : index
    %c0_14 = arith.constant 0 : index
    %19 = vector.load %arg9[%c0_13, %c0_14] : memref<1x128xf32, #tpu.memory_space<vmem>>, vector<1x128xf32>
    tpu.vector_store %arg9[%c0_13, %c0_14], %18 {strides = array<i32>} : memref<1x128xf32, #tpu.memory_space<vmem>>, vector<1x128xf32>,
    %c0_i32_15 = arith.constant 0 : i32
    %20 = arith.cmpi eq, %arg1, %c0_i32_15 : i32
    %21 = arith.extui %20 : i1 to i32
    %c0_i32_16 = arith.constant 0 : i32
    %22 = arith.cmpi ne, %21, %c0_i32_16 : i32
    scf.if %22 {
      %c0_17 = arith.constant 0 : index
      %c0_18 = arith.constant 0 : index
      %23 = vector.load %arg9[%c0_17, %c0_18] : memref<1x128xf32, #tpu.memory_space<vmem>>, vector<1x128xf32>
      %cst_19 = arith.constant 1.562500e-02 : f32
      %24 = vector.broadcast %cst_19 : f32 to vector<1x128xf32>
      %25 = arith.mulf %23, %24 : vector<1x128xf32>
      %26 = arith.truncf %25 : vector<1x128xf32> to vector<1x128xbf16>
      %c0_20 = arith.constant 0 : index
      %c0_21 = arith.constant 0 : index
      %27 = vector.load %arg6[%c0_20, %c0_21] : memref<128x384xbf16, #tpu.memory_space<vmem>>, vector<128x384xbf16>
      %cst_22 = arith.constant dense<0.000000e+00> : vector<1x384xf32>
      %28 = tpu.matmul %26, %27, %cst_22 {dimension_numbers = #tpu.dot_dimension_numbers<[1], [0], [0], [1], [0, 0, 1, 1], [], []>} : vector<1x128xbf16>, vector<128x384xbf16>, vector<1x384xf32> -> vector<1x384xf32>
      %c0_23 = arith.constant 0 : index
      %c0_24 = arith.constant 0 : index
      %29 = vector.load %arg7[%c0_23, %c0_24] : memref<1x384xf32, #tpu.memory_space<vmem>>, vector<1x384xf32>
      %30 = arith.addf %28, %29 : vector<1x384xf32>
      %c0_25 = arith.constant 0 : index
      %c0_26 = arith.constant 0 : index
      %c0_27 = arith.constant 0 : index
      %31 = vector.load %arg8[%c0_25, %c0_26, %c0_27] : memref<1x1x384xf32, #tpu.memory_space<vmem>>, vector<1x1x384xf32>
      %32 = vector.shape_cast %31 : vector<1x1x384xf32> to vector<1x384xf32>
      %33 = vector.shape_cast %30 : vector<1x384xf32> to vector<1x1x384xf32>
      tpu.vector_store %arg8[%c0_25, %c0_26, %c0_27], %33 {strides = array<i32>} : memref<1x1x384xf32, #tpu.memory_space<vmem>>, vector<1x1x384xf32>,
    } else {
    }
    return
  }
  func.func @transform_0(%arg0: i32, %arg1: i32) -> (i32, i32, i32) {
    %c0_i32 = arith.constant 0 : i32
    %c0_i32_0 = arith.constant 0 : i32
    return %arg0, %arg1, %c0_i32 : i32, i32, i32
  }
  func.func @transform_1(%arg0: i32, %arg1: i32) -> (i32, i32) {
    %c0_i32 = arith.constant 0 : i32
    %c0_i32_0 = arith.constant 0 : i32
    %c0_i32_1 = arith.constant 0 : i32
    return %c0_i32, %c0_i32_0 : i32, i32
  }
  func.func @transform_2(%arg0: i32, %arg1: i32) -> (i32, i32) {
    %c0_i32 = arith.constant 0 : i32
    %c0_i32_0 = arith.constant 0 : i32
    %c0_i32_1 = arith.constant 0 : i32
    return %c0_i32, %c0_i32_0 : i32, i32
  }
  func.func @transform_3(%arg0: i32, %arg1: i32) -> (i32, i32) {
    %c0_i32 = arith.constant 0 : i32
    %c0_i32_0 = arith.constant 0 : i32
    %c0_i32_1 = arith.constant 0 : i32
    return %c0_i32, %c0_i32_0 : i32, i32
  }
  func.func @transform_4(%arg0: i32, %arg1: i32) -> (i32, i32) {
    %c0_i32 = arith.constant 0 : i32
    %c0_i32_0 = arith.constant 0 : i32
    %c0_i32_1 = arith.constant 0 : i32
    return %c0_i32, %c0_i32_0 : i32, i32
  }
  func.func @transform_5(%arg0: i32, %arg1: i32) -> (i32, i32) {
    %c0_i32 = arith.constant 0 : i32
    %c0_i32_0 = arith.constant 0 : i32
    %c0_i32_1 = arith.constant 0 : i32
    return %c0_i32, %c0_i32_0 : i32, i32
  }
  func.func @transform_6(%arg0: i32, %arg1: i32) -> (i32, i32, i32) {
    %c0_i32 = arith.constant 0 : i32
    %c0_i32_0 = arith.constant 0 : i32
    %c0_i32_1 = arith.constant 0 : i32
    return %arg0, %c0_i32, %c0_i32_0 : i32, i32, i32
  }
}

</mosaic_0001>

<llo_original>
// kernel: birdclef23_forward.2
$region0: #{birdclef23_forward.2}
  #allocation0 [shape = 'u32[]', space=smem, size = 0x4, offset = 0x4, fixed_abs, tag = 'smem constant byte address 0x4 - core index']
  #allocation1 [shape = 'u32[144,128]{1,0:T(1,128)}', space=vmem, size = 0x12000, scoped, tag = 'internal scratch']
  %s0 = inlined_call_operand.vmem [shape: bf16[128,9], index: 0, kind: input, shape index: {}]
  %s1 = inlined_call_operand.vmem [shape: bf16[9,128], index: 1, kind: input, shape index: {}]
  %s2 = inlined_call_operand.vmem [shape: f32[1,128], index: 2, kind: input, shape index: {}]
  %s3 = inlined_call_operand.vmem [shape: f32[1,128], index: 3, kind: input, shape index: {}]
  %s4 = inlined_call_operand.vmem [shape: bf16[128,128], index: 4, kind: output, shape index: {}]
  %s5 = sld [smem:[#allocation0]]
  $region26: #{birdclef23_forward.2} parent=0
    _
  %s7 = ssub.s32 1, %s5
  %s8 = scalar_select 0, %s7, %s5
  // Predicated region
  $region2: #{birdclef23_forward.2} parent=0 // pred_check
    _
  $region3: #{birdclef23_forward.2} parent=0 // pred_check_branch
    %10 = sbr.rel (0) target = $region5
  $region4: #{birdclef23_forward.2} parent=0 // pred_region
    _
  $region5: #{birdclef23_forward.2} parent=0 // pred_fallthru
    _
  // Predicated region
  $region6: #{birdclef23_forward.2} parent=0 // pred_check
    _
  $region7: #{birdclef23_forward.2} parent=0 // pred_check_branch
    %12 = sbr.rel (0) target = $region9
  $region8: #{birdclef23_forward.2} parent=0 // pred_region
    _
  $region9: #{birdclef23_forward.2} parent=0 // pred_fallthru
    _
  // Predicated region
  $region10: #{birdclef23_forward.2} parent=0 // pred_check
    _
  $region11: #{birdclef23_forward.2} parent=0 // pred_check_branch
    %14 = sbr.rel (0) target = $region13
  $region12: #{birdclef23_forward.2} parent=0 // pred_region
    _
  $region13: #{birdclef23_forward.2} parent=0 // pred_fallthru
    _
  // Predicated region
  $region14: #{birdclef23_forward.2} parent=0 // pred_check
    _
  $region15: #{birdclef23_forward.2} parent=0 // pred_check_branch
    %16 = sbr.rel (0) target = $region17
  $region16: #{birdclef23_forward.2} parent=0 // pred_region
    _
  $region17: #{birdclef23_forward.2} parent=0 // pred_fallthru
    _
  %v18 = vld [vmem:[%s0] sm:$0xf]
  %v19 = vld [vmem:[%s0 + $0x4] sm:$0xf]
  %v20 = vld [vmem:[%s0 + $0x8] sm:$0xf]
  %v21 = vld [vmem:[%s0 + $0xc] sm:$0xf]
  %v22 = vld [vmem:[%s0 + $0x10] sm:$0xf]
  %v23 = vld [vmem:[%s0 + $0x14] sm:$0xf]
  %v24 = vld [vmem:[%s0 + $0x18] sm:$0xf]
  %v25 = vld [vmem:[%s0 + $0x1c] sm:$0xf]
  %v26 = vld [vmem:[%s0 + $0x20] sm:$0xf]
  %v27 = vld [vmem:[%s0 + $0x24] sm:$0xf]
  %v28 = vld [vmem:[%s0 + $0x28] sm:$0xf]
  %v29 = vld [vmem:[%s0 + $0x2c] sm:$0xf]
  %v30 = vld [vmem:[%s0 + $0x30] sm:$0xf]
  %v31 = vld [vmem:[%s0 + $0x34] sm:$0xf]
  %v32 = vld [vmem:[%s0 + $0x38] sm:$0xf]
  %v33 = vld [vmem:[%s0 + $0x3c] sm:$0xf]
  %v34 = vld [vmem:[%s1] sm:$0xf]
  %v35 = vld [vmem:[%s1 + $0x4] sm:$0x1]
  %v52 = vunpack.c.l.b16 %v18
  %v53 = vunpack.c.l.b16 %v19
  %v54 = vunpack.c.l.b16 %v20
  %v55 = vunpack.c.l.b16 %v21
  %v56 = vunpack.c.l.b16 %v22
  %v57 = vunpack.c.l.b16 %v23
  %v58 = vunpack.c.l.b16 %v24
  %v59 = vunpack.c.l.b16 %v25
  %v60 = vunpack.c.l.b16 %v26
  %v61 = vunpack.c.l.b16 %v27
  %v62 = vunpack.c.l.b16 %v28
  %v63 = vunpack.c.l.b16 %v29
  %v64 = vunpack.c.l.b16 %v30
  %v65 = vunpack.c.l.b16 %v31
  %v66 = vunpack.c.l.b16 %v32
  %v67 = vunpack.c.l.b16 %v33
  %v68 = vpack.c.b16 %v53, %v52
  %v69 = vpack.c.b16 %v55, %v54
  %v70 = vpack.c.b16 %v57, %v56
  %v71 = vpack.c.b16 %v59, %v58
  %v72 = vpack.c.b16 %v61, %v60
  %v73 = vpack.c.b16 %v63, %v62
  %v74 = vpack.c.b16 %v65, %v64
  %v75 = vpack.c.b16 %v67, %v66
  %v78 = vunpack.c.l.b16 %v34
  %v79 = vunpack.c.l.b16 %v35
  %v80 = vpack.c.b16 %v79, %v78
  %vm81 = vcmask 72704
  %v83 = vsel %vm81, %v68, 0
  %v86 = vsel %vm81, %v69, 0
  %v89 = vsel %vm81, %v70, 0
  %v92 = vsel %vm81, %v71, 0
  %v95 = vsel %vm81, %v72, 0
  %v98 = vsel %vm81, %v73, 0
  %v101 = vsel %vm81, %v74, 0
  %v104 = vsel %vm81, %v75, 0
  %vm106 = vcmask 1043456
  %vm107 = vcmask 1044480
  %v108 = vsel %vm106, 4294967295, 65535
  %v109 = vsel %vm107, %v108, 0
  %v111 = vand.u32 %v80, %v109
  %113 = vmatprep.subr.bf16.mxu0 0
  %114 = vmatpush1.bf16.msra.mxu0 0
  %115 = vmatprep.subr.bf16.mxu0 0
  %116 = vmatpush1.bf16.msra.mxu0 0
  %117 = vmatprep.subr.bf16.mxu0 0
  %118 = vmatpush1.bf16.msra.mxu0 0
  %119 = vmatprep.subr.bf16.mxu0 0
  %120 = vmatpush1.bf16.msra.mxu0 0
  %121 = vmatprep.subr.bf16.mxu0 0
  %122 = vmatpush1.bf16.msra.mxu0 0
  %123 = vmatprep.subr.bf16.mxu0 0
  %124 = vmatpush1.bf16.msra.mxu0 0
  %125 = vmatprep.subr.bf16.mxu0 0
  %126 = vmatpush1.bf16.msra.mxu0 0
  %127 = vmatprep.subr.bf16.mxu0 0
  %128 = vmatpush1.bf16.msra.mxu0 %v111
  %129 = vmatprep.subr.bf16.mxu0 0
  %130 = vmatpush2.bf16.msra.mxu0 0
  %131 = vmatprep.subr.bf16.mxu0 0
  %132 = vmatpush2.bf16.msra.mxu0 0
  %133 = vmatprep.subr.bf16.mxu0 0
  %134 = vmatpush2.bf16.msra.mxu0 0
  %135 = vmatprep.subr.bf16.mxu0 0
  %136 = vmatpush2.bf16.msra.mxu0 0
  %137 = vmatprep.subr.bf16.mxu0 0
  %138 = vmatpush2.bf16.msra.mxu0 0
  %139 = vmatprep.subr.bf16.mxu0 0
  %140 = vmatpush2.bf16.msra.mxu0 0
  %141 = vmatprep.subr.bf16.mxu0 0
  %142 = vmatpush2.bf16.msra.mxu0 0
  %143 = vmatprep.subr.bf16.mxu0 0
  %144 = vmatpush2.bf16.msra.mxu0 0
  %145 = vmatprep.mubr.bf16.mxu0 0
  %146 = vmatmul.mubr.bf16.gmra.mxu0 %v83
  %v147 = vpop.f32.mrf.mxu0
  %v148 = vadd.f32 0.0, %v147
  %v149 = vpop.f32.mrf.mxu0
  %v150 = vpop.f32.mrf.mxu0
  %v151 = vadd.f32 0.0, %v150
  %v152 = vpop.f32.mrf.mxu0
  %153 = vmatprep.mubr.bf16.mxu0 0
  %154 = vmatmul.mubr.bf16.gmra.mxu0 %v86
  %v155 = vpop.f32.mrf.mxu0
  %v156 = vadd.f32 0.0, %v155
  %v157 = vpop.f32.mrf.mxu0
  %v158 = vpop.f32.mrf.mxu0
  %v159 = vadd.f32 0.0, %v158
  %v160 = vpop.f32.mrf.mxu0
  %161 = vmatprep.mubr.bf16.mxu0 0
  %162 = vmatmul.mubr.bf16.gmra.mxu0 %v89
  %v163 = vpop.f32.mrf.mxu0
  %v164 = vadd.f32 0.0, %v163
  %v165 = vpop.f32.mrf.mxu0
  %v166 = vpop.f32.mrf.mxu0
  %v167 = vadd.f32 0.0, %v166
  %v168 = vpop.f32.mrf.mxu0
  %169 = vmatprep.mubr.bf16.mxu0 0
  %170 = vmatmul.mubr.bf16.gmra.mxu0 %v92
  %v171 = vpop.f32.mrf.mxu0
  %v172 = vadd.f32 0.0, %v171
  %v173 = vpop.f32.mrf.mxu0
  %v174 = vpop.f32.mrf.mxu0
  %v175 = vadd.f32 0.0, %v174
  %v176 = vpop.f32.mrf.mxu0
  %177 = vmatprep.mubr.bf16.mxu0 0
  %178 = vmatmul.mubr.bf16.gmra.mxu0 %v95
  %v179 = vpop.f32.mrf.mxu0
  %v180 = vadd.f32 0.0, %v179
  %v181 = vpop.f32.mrf.mxu0
  %v182 = vpop.f32.mrf.mxu0
  %v183 = vadd.f32 0.0, %v182
  %v184 = vpop.f32.mrf.mxu0
  %185 = vmatprep.mubr.bf16.mxu0 0
  %186 = vmatmul.mubr.bf16.gmra.mxu0 %v98
  %v187 = vpop.f32.mrf.mxu0
  %v188 = vadd.f32 0.0, %v187
  %v189 = vpop.f32.mrf.mxu0
  %v190 = vpop.f32.mrf.mxu0
  %v191 = vadd.f32 0.0, %v190
  %v192 = vpop.f32.mrf.mxu0
  %193 = vmatprep.mubr.bf16.mxu0 0
  %194 = vmatmul.mubr.bf16.gmra.mxu0 %v101
  %v195 = vpop.f32.mrf.mxu0
  %v196 = vadd.f32 0.0, %v195
  %v197 = vpop.f32.mrf.mxu0
  %v198 = vpop.f32.mrf.mxu0
  %v199 = vadd.f32 0.0, %v198
  %v200 = vpop.f32.mrf.mxu0
  %201 = vmatprep.mubr.bf16.mxu0 0
  %202 = vmatmul.mubr.bf16.gmra.mxu0 %v104
  %v203 = vpop.f32.mrf.mxu0
  %v204 = vadd.f32 0.0, %v203
  %v205 = vpop.f32.mrf.mxu0
  %v206 = vpop.f32.mrf.mxu0
  %v207 = vadd.f32 0.0, %v206
  %v208 = vpop.f32.mrf.mxu0
  %209 = vdwg.mxu0
  %v210 = vld [vmem:[%s2] sm:$0x1]
  %v212 = vlaneseq
  %v213 = vshrl.u32 %v212, 7
  %v214 = vsub.s32 0, %v213
  %v215 = vrot.slane %v210, %v214
  %v217 = vmul.f32 %v148, %v215
  %v218 = vmul.f32 %v151, %v215
  %v219 = vmul.f32 %v156, %v215
  %v220 = vmul.f32 %v159, %v215
  %v221 = vmul.f32 %v164, %v215
  %v222 = vmul.f32 %v167, %v215
  %v223 = vmul.f32 %v172, %v215
  %v224 = vmul.f32 %v175, %v215
  %v225 = vmul.f32 %v180, %v215
  %v226 = vmul.f32 %v183, %v215
  %v227 = vmul.f32 %v188, %v215
  %v228 = vmul.f32 %v191, %v215
  %v229 = vmul.f32 %v196, %v215
  %v230 = vmul.f32 %v199, %v215
  %v231 = vmul.f32 %v204, %v215
  %v232 = vmul.f32 %v207, %v215
  %v233 = vld [vmem:[%s3] sm:$0x1]
  %v235 = vlaneseq
  %v236 = vshrl.u32 %v235, 7
  %v237 = vsub.s32 0, %v236
  %v238 = vrot.slane %v233, %v237
  %v240 = vadd.f32 %v217, %v238
  %v241 = vadd.f32 %v218, %v238
  %v242 = vadd.f32 %v219, %v238
  %v243 = vadd.f32 %v220, %v238
  %v244 = vadd.f32 %v221, %v238
  %v245 = vadd.f32 %v222, %v238
  %v246 = vadd.f32 %v223, %v238
  %v247 = vadd.f32 %v224, %v238
  %v248 = vadd.f32 %v225, %v238
  %v249 = vadd.f32 %v226, %v238
  %v250 = vadd.f32 %v227, %v238
  %v251 = vadd.f32 %v228, %v238
  %v252 = vadd.f32 %v229, %v238
  %v253 = vadd.f32 %v230, %v238
  %v254 = vadd.f32 %v231, %v238
  %v255 = vadd.f32 %v232, %v238
  %v256 = vmax.f32 %v240, 0.0
  %v257 = vmax.f32 %v241, 0.0
  %v258 = vmax.f32 %v242, 0.0
  %v259 = vmax.f32 %v243, 0.0
  %v260 = vmax.f32 %v244, 0.0
  %v261 = vmax.f32 %v245, 0.0
  %v262 = vmax.f32 %v246, 0.0
  %v263 = vmax.f32 %v247, 0.0
  %v264 = vmax.f32 %v248, 0.0
  %v265 = vmax.f32 %v249, 0.0
  %v266 = vmax.f32 %v250, 0.0
  %v267 = vmax.f32 %v251, 0.0
  %v268 = vmax.f32 %v252, 0.0
  %v269 = vmax.f32 %v253, 0.0
  %v270 = vmax.f32 %v254, 0.0
  %v271 = vmax.f32 %v255, 0.0
  %v272 = vpack.c.bf16 %v257, %v256
  %v273 = vpack.c.bf16 %v259, %v258
  %v274 = vpack.c.bf16 %v261, %v260
  %v275 = vpack.c.bf16 %v263, %v262
  %v276 = vpack.c.bf16 %v265, %v264
  %v277 = vpack.c.bf16 %v267, %v266
  %v278 = vpack.c.bf16 %v269, %v268
  %v279 = vpack.c.bf16 %v271, %v270
  %v288 = vunpack.c.l.b16 %v272
  %v289 = vunpack.c.h.b16 %v272
  %v290 = vunpack.c.l.b16 %v273
  %v291 = vunpack.c.h.b16 %v273
  %v292 = vunpack.c.l.b16 %v274
  %v293 = vunpack.c.h.b16 %v274
  %v294 = vunpack.c.l.b16 %v275
  %v295 = vunpack.c.h.b16 %v275
  %v296 = vunpack.c.l.b16 %v276
  %v297 = vunpack.c.h.b16 %v276
  %v298 = vunpack.c.l.b16 %v277
  %v299 = vunpack.c.h.b16 %v277
  %v300 = vunpack.c.l.b16 %v278
  %v301 = vunpack.c.h.b16 %v278
  %v302 = vunpack.c.l.b16 %v279
  %v303 = vunpack.c.h.b16 %v279
  %v304 = vpack.c.b16 %v288, %v288
  %v305 = vpack.c.b16 %v289, %v289
  %v306 = vpack.c.b16 %v290, %v290
  %v307 = vpack.c.b16 %v291, %v291
  %v308 = vpack.c.b16 %v292, %v292
  %v309 = vpack.c.b16 %v293, %v293
  %v310 = vpack.c.b16 %v294, %v294
  %v311 = vpack.c.b16 %v295, %v295
  %v312 = vpack.c.b16 %v296, %v296
  %v313 = vpack.c.b16 %v297, %v297
  %v314 = vpack.c.b16 %v298, %v298
  %v315 = vpack.c.b16 %v299, %v299
  %v316 = vpack.c.b16 %v300, %v300
  %v317 = vpack.c.b16 %v301, %v301
  %v318 = vpack.c.b16 %v302, %v302
  %v319 = vpack.c.b16 %v303, %v303
  %336 = vst [vmem:[%s4] sm:$0xf] %v304
  %337 = vst [vmem:[%s4 + $0x4] sm:$0xf] %v305
  %338 = vst [vmem:[%s4 + $0x8] sm:$0xf] %v306
  %339 = vst [vmem:[%s4 + $0xc] sm:$0xf] %v307
  %340 = vst [vmem:[%s4 + $0x10] sm:$0xf] %v308
  %341 = vst [vmem:[%s4 + $0x14] sm:$0xf] %v309
  %342 = vst [vmem:[%s4 + $0x18] sm:$0xf] %v310
  %343 = vst [vmem:[%s4 + $0x1c] sm:$0xf] %v311
  %344 = vst [vmem:[%s4 + $0x20] sm:$0xf] %v312
  %345 = vst [vmem:[%s4 + $0x24] sm:$0xf] %v313
  %346 = vst [vmem:[%s4 + $0x28] sm:$0xf] %v314
  %347 = vst [vmem:[%s4 + $0x2c] sm:$0xf] %v315
  %348 = vst [vmem:[%s4 + $0x30] sm:$0xf] %v316
  %349 = vst [vmem:[%s4 + $0x34] sm:$0xf] %v317
  %350 = vst [vmem:[%s4 + $0x38] sm:$0xf] %v318
  %351 = vst [vmem:[%s4 + $0x3c] sm:$0xf] %v319
  // Predicated region
  $region18: #{birdclef23_forward.2} parent=0 // pred_check
    _
  $region19: #{birdclef23_forward.2} parent=0 // pred_check_branch
    %353 = sbr.rel (0) target = $region21
  $region20: #{birdclef23_forward.2} parent=0 // pred_region
    _
  $region21: #{birdclef23_forward.2} parent=0 // pred_fallthru
    _
  // Predicated region
  $region22: #{birdclef23_forward.2} parent=0 // pred_check
    _
  $region23: #{birdclef23_forward.2} parent=0 // pred_check_branch
    %355 = sbr.rel (0) target = $region25
  $region24: #{birdclef23_forward.2} parent=0 // pred_region
    _
  $region25: #{birdclef23_forward.2} parent=0 // pred_fallthru
    _

// kernel: birdclef23_forward.3
$region0: #{birdclef23_forward.3}
  #allocation0 [shape = 'u32[]', space=smem, size = 0x4, offset = 0x4, fixed_abs, tag = 'smem constant byte address 0x4 - core index']
  #allocation1 [shape = 'u32[144,128]{1,0:T(1,128)}', space=vmem, size = 0x12000, scoped, tag = 'internal scratch']
  #allocation2 [shape = 'f32[1,128]{1,0:T(1,128)}', space=vmem, size = 0x200, scoped, tag = 'scratch operand']
  %s0 = inlined_call_operand.vmem [shape: bf16[2,64,144], index: 0, kind: input, shape index: {}]
  %s1 = inlined_call_operand.vmem [shape: bf16[144,128], index: 1, kind: input, shape index: {}]
  %s2 = inlined_call_operand.vmem [shape: f32[1,128], index: 2, kind: input, shape index: {}]
  %s3 = inlined_call_operand.vmem [shape: f32[1,128], index: 3, kind: input, shape index: {}]
  %s4 = inlined_call_operand.vmem [shape: bf16[128,384], index: 4, kind: input, shape index: {}]
  %s5 = inlined_call_operand.vmem [shape: f32[1,384], index: 5, kind: input, shape index: {}]
  %s6 = inlined_call_operand.vmem [shape: f32[2,1,384], index: 6, kind: output, shape index: {}]
  %s7 = sld [smem:[#allocation0]]
  $region65: #{birdclef23_forward.3} parent=0
    _
  %s9 = ssub.s32 1, %s7
  %s10 = scalar_select 0, %s9, %s7
  loop: start=0, step=1, limit=4
  $region2: #{birdclef23_forward.3} parent=0 // loop_pre_header
    _
  $region3: #{birdclef23_forward.3} parent=0 // loop_header
    %s12 = sphi 0, %s16
    %p13 = scmp.ge.s32.totalorder %s12, 4
    %s19 = sphi 0, %s31
    %s20 = sphi 0, %s27
    %s21 = sphi 0, %s19
    %s22 = sphi 0, %s20
    %s23 = sphi 0, %s21
    %s24 = sphi 0, %s22
    %s36 = sphi 0, %s38
    %s39 = sphi 0, %s36
    %s40 = sphi 0, %s39
    %s56 = sphi 0, %s40
    %s60 = sphi 0, %s60
    %s62 = sphi 0, %s60
    %s63 = sphi 0, %s62
    %s77 = sphi 0, %s63
    %s81 = sphi 0, %s81
    %s83 = sphi 0, %s81
    %s84 = sphi 0, %s83
    %s98 = sphi 0, %s84
    %s102 = sphi 0, %s102
    %s104 = sphi 0, %s102
    %s105 = sphi 0, %s104
    %s119 = sphi 0, %s105
    %s123 = sphi 0, %s123
    %s125 = sphi 0, %s123
    %s126 = sphi 0, %s125
    %s140 = sphi 0, %s126
    %s144 = sphi 0, %s144
    %s146 = sphi 0, %s144
    %s147 = sphi 0, %s146
    %s161 = sphi 0, %s147
    %s167 = sphi 0, %s169
    %s170 = sphi 0, %s167
    %s171 = sphi 0, %s170
    %s187 = sphi 0, %s171
  $region4: #{birdclef23_forward.3} parent=0 // loop_header_branch
    %15 = sbr.rel (%p13) target = $region8
  $region5: #{birdclef23_forward.3} parent=0 // loop_body
    %s17 = ssub.s32 %s12, 1
    %s18 = ssub.s32 %s12, 2
    %s25 = sadd.s32 1, %s20
    %p26 = scmp.ge.s32.totalorder %s25, 1
    %s27 = scalar_select %p26, 0, %s25
    %s28 = sadd.s32 1, %s19
    %s29 = scalar_select %p26, %s28, %s19
    %p30 = scmp.ge.s32.totalorder %s29, 2
    %s31 = scalar_select %p30, 0, %s29
    %s32 = ssub.s32 %s19, %s31
    %s33 = ssub.s32 %s20, %s27
    %s34 = sor.u32 %s32, %s33
    %p35 = scmp.eq.s32.totalorder %s34, 0
    %s37 = sadd.s32 %s36, 1
    %s38 = scalar_select %p35, %s36, %s37
    %p41 = pneg %p35
    %p42 = scmp.eq.s32.totalorder %s12, 1
    %p43 = por %p41, %p42
    %p44 = scmp.ne.s32.totalorder %s36, %s39
    %p45 = scmp.eq.s32.totalorder %s12, 0
    %p46 = por %p44, %p45
    %p47 = scmp.ne.s32.totalorder %s36, %s39
    %p48 = scmp.eq.s32.totalorder %s17, 1
    %p49 = por %p47, %p48
    %p50 = scmp.ne.s32.totalorder %s39, %s40
    %p51 = scmp.eq.s32.totalorder %s17, 0
    %p52 = por %p50, %p51
    %p53 = scmp.ne.s32.totalorder %s39, %s40
    %p54 = scmp.eq.s32.totalorder %s18, 1
    %p55 = por %p53, %p54
    %p57 = scmp.ne.s32.totalorder %s40, %s56
    %p58 = scmp.eq.s32.totalorder %s18, 0
    %p59 = por %p57, %p58
    %s61 = sadd.s32 %s60, 1
    %p64 = scmp.eq.s32.totalorder %s12, 1
    %p65 = scmp.ne.s32.totalorder %s60, %s62
    %p66 = scmp.eq.s32.totalorder %s12, 0
    %p67 = por %p65, %p66
    %p68 = scmp.ne.s32.totalorder %s60, %s62
    %p69 = scmp.eq.s32.totalorder %s17, 1
    %p70 = por %p68, %p69
    %p71 = scmp.ne.s32.totalorder %s62, %s63
    %p72 = scmp.eq.s32.totalorder %s17, 0
    %p73 = por %p71, %p72
    %p74 = scmp.ne.s32.totalorder %s62, %s63
    %p75 = scmp.eq.s32.totalorder %s18, 1
    %p76 = por %p74, %p75
    %p78 = scmp.ne.s32.totalorder %s63, %s77
    %p79 = scmp.eq.s32.totalorder %s18, 0
    %p80 = por %p78, %p79
    %s82 = sadd.s32 %s81, 1
    %p85 = scmp.eq.s32.totalorder %s12, 1
    %p86 = scmp.ne.s32.totalorder %s81, %s83
    %p87 = scmp.eq.s32.totalorder %s12, 0
    %p88 = por %p86, %p87
    %p89 = scmp.ne.s32.totalorder %s81, %s83
    %p90 = scmp.eq.s32.totalorder %s17, 1
    %p91 = por %p89, %p90
    %p92 = scmp.ne.s32.totalorder %s83, %s84
    %p93 = scmp.eq.s32.totalorder %s17, 0
    %p94 = por %p92, %p93
    %p95 = scmp.ne.s32.totalorder %s83, %s84
    %p96 = scmp.eq.s32.totalorder %s18, 1
    %p97 = por %p95, %p96
    %p99 = scmp.ne.s32.totalorder %s84, %s98
    %p100 = scmp.eq.s32.totalorder %s18, 0
    %p101 = por %p99, %p100
    %s103 = sadd.s32 %s102, 1
    %p106 = scmp.eq.s32.totalorder %s12, 1
    %p107 = scmp.ne.s32.totalorder %s102, %s104
    %p108 = scmp.eq.s32.totalorder %s12, 0
    %p109 = por %p107, %p108
    %p110 = scmp.ne.s32.totalorder %s102, %s104
    %p111 = scmp.eq.s32.totalorder %s17, 1
    %p112 = por %p110, %p111
    %p113 = scmp.ne.s32.totalorder %s104, %s105
    %p114 = scmp.eq.s32.totalorder %s17, 0
    %p115 = por %p113, %p114
    %p116 = scmp.ne.s32.totalorder %s104, %s105
    %p117 = scmp.eq.s32.totalorder %s18, 1
    %p118 = por %p116, %p117
    %p120 = scmp.ne.s32.totalorder %s105, %s119
    %p121 = scmp.eq.s32.totalorder %s18, 0
    %p122 = por %p120, %p121
    %s124 = sadd.s32 %s123, 1
    %p127 = scmp.eq.s32.totalorder %s12, 1
    %p128 = scmp.ne.s32.totalorder %s123, %s125
    %p129 = scmp.eq.s32.totalorder %s12, 0
    %p130 = por %p128, %p129
    %p131 = scmp.ne.s32.totalorder %s123, %s125
    %p132 = scmp.eq.s32.totalorder %s17, 1
    %p133 = por %p131, %p132
    %p134 = scmp.ne.s32.totalorder %s125, %s126
    %p135 = scmp.eq.s32.totalorder %s17, 0
    %p136 = por %p134, %p135
    %p137 = scmp.ne.s32.totalorder %s125, %s126
    %p138 = scmp.eq.s32.totalorder %s18, 1
    %p139 = por %p137, %p138
    %p141 = scmp.ne.s32.totalorder %s126, %s140
    %p142 = scmp.eq.s32.totalorder %s18, 0
    %p143 = por %p141, %p142
    %s145 = sadd.s32 %s144, 1
    %p148 = scmp.eq.s32.totalorder %s12, 1
    %p149 = scmp.ne.s32.totalorder %s144, %s146
    %p150 = scmp.eq.s32.totalorder %s12, 0
    %p151 = por %p149, %p150
    %p152 = scmp.ne.s32.totalorder %s144, %s146
    %p153 = scmp.eq.s32.totalorder %s17, 1
    %p154 = por %p152, %p153
    %p155 = scmp.ne.s32.totalorder %s146, %s147
    %p156 = scmp.eq.s32.totalorder %s17, 0
    %p157 = por %p155, %p156
    %p158 = scmp.ne.s32.totalorder %s146, %s147
    %p159 = scmp.eq.s32.totalorder %s18, 1
    %p160 = por %p158, %p159
    %p162 = scmp.ne.s32.totalorder %s147, %s161
    %p163 = scmp.eq.s32.totalorder %s18, 0
    %p164 = por %p162, %p163
    %s165 = ssub.s32 %s19, %s31
    %p166 = scmp.eq.s32.totalorder %s165, 0
    %s168 = sadd.s32 %s167, 1
    %s169 = scalar_select %p166, %s167, %s168
    %p172 = pneg %p166
    %p173 = scmp.eq.s32.totalorder %s12, 1
    %p174 = por %p172, %p173
    %p175 = scmp.ne.s32.totalorder %s167, %s170
    %p176 = scmp.eq.s32.totalorder %s12, 0
    %p177 = por %p175, %p176
    %p178 = scmp.ne.s32.totalorder %s167, %s170
    %p179 = scmp.eq.s32.totalorder %s17, 1
    %p180 = por %p178, %p179
    %p181 = scmp.ne.s32.totalorder %s170, %s171
    %p182 = scmp.eq.s32.totalorder %s17, 0
    %p183 = por %p181, %p182
    %p184 = scmp.ne.s32.totalorder %s170, %s171
    %p185 = scmp.eq.s32.totalorder %s18, 1
    %p186 = por %p184, %p185
    %p188 = scmp.ne.s32.totalorder %s171, %s187
    %p189 = scmp.eq.s32.totalorder %s18, 0
    %p190 = por %p188, %p189
    %p191 = scmp.le.s32.totalorder 1, %s12
    %p192 = scmp.lt.s32.totalorder %s12, 3
    %p193 = pnand %p191, %p192
    %p194 = pneg %p193
    // Predicated region
    $region9: #{birdclef23_forward.3} parent=5 // pred_check
      _
    $region10: #{birdclef23_forward.3} parent=5 // pred_check_branch
      %196 = sbr.rel (%p193) target = $region12
    $region11: #{birdclef23_forward.3} parent=5 // pred_region
      %s197 = ssub.s32 %s12, 1
      // Predicated region
      $region13: #{birdclef23_forward.3} parent=11 // pred_check
        %p198 = pneg %p73
      $region14: #{birdclef23_forward.3} parent=11 // pred_check_branch
        %200 = sbr.rel (%p198) target = $region16
      $region15: #{birdclef23_forward.3} parent=11 // pred_region
        _
      $region16: #{birdclef23_forward.3} parent=11 // pred_fallthru
        _
      // Predicated region
      $region17: #{birdclef23_forward.3} parent=11 // pred_check
        %p201 = pneg %p94
      $region18: #{birdclef23_forward.3} parent=11 // pred_check_branch
        %203 = sbr.rel (%p201) target = $region20
      $region19: #{birdclef23_forward.3} parent=11 // pred_region
        _
      $region20: #{birdclef23_forward.3} parent=11 // pred_fallthru
        _
      // Predicated region
      $region21: #{birdclef23_forward.3} parent=11 // pred_check
        %p204 = pneg %p115
      $region22: #{birdclef23_forward.3} parent=11 // pred_check_branch
        %206 = sbr.rel (%p204) target = $region24
      $region23: #{birdclef23_forward.3} parent=11 // pred_region
        _
      $region24: #{birdclef23_forward.3} parent=11 // pred_fallthru
        _
      // Predicated region
      $region25: #{birdclef23_forward.3} parent=11 // pred_check
        %p207 = pneg %p136
      $region26: #{birdclef23_forward.3} parent=11 // pred_check_branch
        %209 = sbr.rel (%p207) target = $region28
      $region27: #{birdclef23_forward.3} parent=11 // pred_region
        _
      $region28: #{birdclef23_forward.3} parent=11 // pred_fallthru
        _
      // Predicated region
      $region29: #{birdclef23_forward.3} parent=11 // pred_check
        %p210 = pneg %p157
      $region30: #{birdclef23_forward.3} parent=11 // pred_check_branch
        %212 = sbr.rel (%p210) target = $region32
      $region31: #{birdclef23_forward.3} parent=11 // pred_region
        _
      $region32: #{birdclef23_forward.3} parent=11 // pred_fallthru
        _
    $region12: #{birdclef23_forward.3} parent=5 // pred_fallthru
      _
    %p213 = scmp.lt.s32.totalorder %s12, 2
    // Predicated region
    $region33: #{birdclef23_forward.3} parent=5 // pred_check
      %p214 = pneg %p213
    $region34: #{birdclef23_forward.3} parent=5 // pred_check_branch
      %216 = sbr.rel (%p214) target = $region36
    $region35: #{birdclef23_forward.3} parent=5 // pred_region
      // Predicated region
      $region37: #{birdclef23_forward.3} parent=35 // pred_check
        %p217 = pneg %p46
      $region38: #{birdclef23_forward.3} parent=35 // pred_check_branch
        %219 = sbr.rel (%p217) target = $region40
      $region39: #{birdclef23_forward.3} parent=35 // pred_region
        %s220 = smul.u32 8, %s20
        %p221 = scmp.lt.s32.totalorder %s19, 1
        %s222 = scalar_select %p221, %s19, 1
        %p223 = scmp.lt.s32.totalorder %s220, 7
        %s224 = scalar_select %p223, %s220, 7
        %s225 = smul.addr %s224, 2
        %s226 = smul.addr %s222, 16
        %s227 = sadd.s32 %s225, %s226
        %s228 = smul.addr %s227, 4
        %s229 = scalar_lea.vmem %s0, %s228
        %s230 = smul.u32 8, %s20
      $region40: #{birdclef23_forward.3} parent=35 // pred_fallthru
        _
    $region36: #{birdclef23_forward.3} parent=5 // pred_fallthru
      _
    %p231 = scmp.le.s32.totalorder 1, %s12
    %p232 = scmp.lt.s32.totalorder %s12, 3
    %p233 = pnand %p231, %p232
    %p234 = pneg %p233
    // Predicated region
    $region41: #{birdclef23_forward.3} parent=5 // pred_check
      _
    $region42: #{birdclef23_forward.3} parent=5 // pred_check_branch
      %236 = sbr.rel (%p233) target = $region44
    $region43: #{birdclef23_forward.3} parent=5 // pred_region
      %s237 = ssub.s32 %s12, 1
      %s238 = smul.u32 8, %s22
      %p239 = scmp.lt.s32.totalorder %s21, 1
      %s240 = scalar_select %p239, %s21, 1
      %p241 = scmp.lt.s32.totalorder %s238, 7
      %s242 = scalar_select %p241, %s238, 7
      %s243 = smul.addr %s242, 2
      %s244 = smul.addr %s240, 16
      %s245 = sadd.s32 %s243, %s244
      %s246 = smul.addr %s245, 4
      %s247 = scalar_lea.vmem %s0, %s246
      %p248 = pneg %p52
      %p249 = pneg %p49
      %p250 = pneg %p73
      %p251 = pneg %p70
      %p252 = pneg %p94
      %p253 = pneg %p91
      %p254 = pneg %p115
      %p255 = pneg %p112
      %p256 = pneg %p136
      %p257 = pneg %p133
      %p258 = pneg %p157
      %p259 = pneg %p154
      %p260 = pneg %p183
      %p261 = pneg %p180
      %p262 = scmp.lt.s32.totalorder %s21, 1
      %s263 = scalar_select %p262, %s21, 1
      %s264 = smul.addr %s263, 3
      %s265 = scalar_lea.vmem %s6, %s264
      %s266 = smul.u32 8, %s22
      %p267 = scmp.lt.s32.totalorder %s21, 1
      %s268 = scalar_select %p267, %s21, 1
      %p269 = scmp.lt.s32.totalorder %s266, 7
      %s270 = scalar_select %p269, %s266, 7
      %s271 = smul.addr %s270, 2
      %s272 = smul.addr %s268, 16
      %s273 = sadd.s32 %s271, %s272
      %s274 = smul.addr %s273, 4
      %s275 = scalar_lea.vmem %s0, %s274
      %s276 = smul.u32 8, %s22
      %p277 = scmp.lt.s32.totalorder %s21, 1
      %s278 = scalar_select %p277, %s21, 1
      %s279 = smul.addr %s278, 3
      %s280 = scalar_lea.vmem %s6, %s279
      %p282 = scmp.eq.s32.totalorder %s22, 0
      // Predicated region
      $region45: #{birdclef23_forward.3} parent=43 // pred_check
        %p283 = pneg %p282
      $region46: #{birdclef23_forward.3} parent=43 // pred_check_branch
        %285 = sbr.rel (%p283) target = $region48
      $region47: #{birdclef23_forward.3} parent=43 // pred_region
        %286 = vst [vmem:[#allocation2] sm:$0x1] 0.0
      $region48: #{birdclef23_forward.3} parent=43 // pred_fallthru
        _
      %v287 = vld [vmem:[%s275] sm:$0xff]
      %v288 = vld [vmem:[%s275 + $0x8] sm:$0xff]
      %v289 = vld [vmem:[%s275 + $0x10] sm:$0xff]
      %v290 = vld [vmem:[%s275 + $0x18] sm:$0xff]
      %v291 = vld [vmem:[%s275 + $0x20] sm:$0xff]
      %v292 = vld [vmem:[%s275 + $0x28] sm:$0xff]
      %v293 = vld [vmem:[%s275 + $0x30] sm:$0xff]
      %v294 = vld [vmem:[%s275 + $0x38] sm:$0xff]
      %v295 = vld [vmem:[%s1] sm:$0xf]
      %v296 = vld [vmem:[%s1 + $0x4] sm:$0xf]
      %v297 = vld [vmem:[%s1 + $0x8] sm:$0xf]
      %v298 = vld [vmem:[%s1 + $0xc] sm:$0xf]
      %v299 = vld [vmem:[%s1 + $0x10] sm:$0xf]
      %v300 = vld [vmem:[%s1 + $0x14] sm:$0xf]
      %v301 = vld [vmem:[%s1 + $0x18] sm:$0xf]
      %v302 = vld [vmem:[%s1 + $0x1c] sm:$0xf]
      %v303 = vld [vmem:[%s1 + $0x20] sm:$0xf]
      %v304 = vld [vmem:[%s1 + $0x24] sm:$0xf]
      %v305 = vld [vmem:[%s1 + $0x28] sm:$0xf]
      %v306 = vld [vmem:[%s1 + $0x2c] sm:$0xf]
      %v307 = vld [vmem:[%s1 + $0x30] sm:$0xf]
      %v308 = vld [vmem:[%s1 + $0x34] sm:$0xf]
      %v309 = vld [vmem:[%s1 + $0x38] sm:$0xf]
      %v310 = vld [vmem:[%s1 + $0x3c] sm:$0xf]
      %v311 = vld [vmem:[%s1 + $0x40] sm:$0xf]
      %v312 = vld [vmem:[%s1 + $0x44] sm:$0xf]
      %v321 = vunpack.c.l.b16 %v287
      %v322 = vunpack.c.h.b16 %v287
      %v323 = vunpack.c.l.b16 %v288
      %v324 = vunpack.c.h.b16 %v288
      %v325 = vunpack.c.l.b16 %v289
      %v326 = vunpack.c.h.b16 %v289
      %v327 = vunpack.c.l.b16 %v290
      %v328 = vunpack.c.h.b16 %v290
      %v329 = vunpack.c.l.b16 %v291
      %v330 = vunpack.c.h.b16 %v291
      %v331 = vunpack.c.l.b16 %v292
      %v332 = vunpack.c.h.b16 %v292
      %v333 = vunpack.c.l.b16 %v293
      %v334 = vunpack.c.h.b16 %v293
      %v335 = vunpack.c.l.b16 %v294
      %v336 = vunpack.c.h.b16 %v294
      %v337 = vpack.c.b16 %v323, %v321
      %v338 = vpack.c.b16 %v324, %v322
      %v339 = vpack.c.b16 %v327, %v325
      %v340 = vpack.c.b16 %v328, %v326
      %v341 = vpack.c.b16 %v331, %v329
      %v342 = vpack.c.b16 %v332, %v330
      %v343 = vpack.c.b16 %v335, %v333
      %v344 = vpack.c.b16 %v336, %v334
      %v367 = vunpack.c.l.b16 %v295
      %v368 = vunpack.c.l.b16 %v296
      %v369 = vunpack.c.l.b16 %v297
      %v370 = vunpack.c.l.b16 %v298
      %v371 = vunpack.c.l.b16 %v299
      %v372 = vunpack.c.l.b16 %v300
      %v373 = vunpack.c.l.b16 %v301
      %v374 = vunpack.c.l.b16 %v302
      %v375 = vunpack.c.l.b16 %v303
      %v376 = vunpack.c.l.b16 %v304
      %v377 = vunpack.c.l.b16 %v305
      %v378 = vunpack.c.l.b16 %v306
      %v379 = vunpack.c.l.b16 %v307
      %v380 = vunpack.c.l.b16 %v308
      %v381 = vunpack.c.l.b16 %v309
      %v382 = vunpack.c.l.b16 %v310
      %v383 = vunpack.c.l.b16 %v311
      %v384 = vunpack.c.l.b16 %v312
      %v385 = vpack.c.b16 %v368, %v367
      %v386 = vpack.c.b16 %v370, %v369
      %v387 = vpack.c.b16 %v372, %v371
      %v388 = vpack.c.b16 %v374, %v373
      %v389 = vpack.c.b16 %v376, %v375
      %v390 = vpack.c.b16 %v378, %v377
      %v391 = vpack.c.b16 %v380, %v379
      %v392 = vpack.c.b16 %v382, %v381
      %v393 = vpack.c.b16 %v384, %v383
      %vm403 = vcmask 130048
      %v405 = vsel %vm403, %v338, 0
      %v408 = vsel %vm403, %v340, 0
      %v411 = vsel %vm403, %v342, 0
      %v414 = vsel %vm403, %v344, 0
      %416 = vmatprep.subr.bf16.mxu0 0
      %417 = vmatpush1.bf16.msra.mxu0 %v392
      %418 = vmatprep.subr.bf16.mxu0 0
      %419 = vmatpush1.bf16.msra.mxu0 %v391
      %420 = vmatprep.subr.bf16.mxu0 0
      %421 = vmatpush1.bf16.msra.mxu0 %v390
      %422 = vmatprep.subr.bf16.mxu0 0
      %423 = vmatpush1.bf16.msra.mxu0 %v389
      %424 = vmatprep.subr.bf16.mxu0 0
      %425 = vmatpush1.bf16.msra.mxu0 %v388
      %426 = vmatprep.subr.bf16.mxu0 0
      %427 = vmatpush1.bf16.msra.mxu0 %v387
      %428 = vmatprep.subr.bf16.mxu0 0
      %429 = vmatpush1.bf16.msra.mxu0 %v386
      %430 = vmatprep.subr.bf16.mxu0 0
      %431 = vmatpush1.bf16.msra.mxu0 %v385
      %432 = vmatprep.subr.bf16.mxu0 0
      %433 = vmatpush2.bf16.msra.mxu0 0
      %434 = vmatprep.subr.bf16.mxu0 0
      %435 = vmatpush2.bf16.msra.mxu0 0
      %436 = vmatprep.subr.bf16.mxu0 0
      %437 = vmatpush2.bf16.msra.mxu0 0
      %438 = vmatprep.subr.bf16.mxu0 0
      %439 = vmatpush2.bf16.msra.mxu0 0
      %440 = vmatprep.subr.bf16.mxu0 0
      %441 = vmatpush2.bf16.msra.mxu0 0
      %442 = vmatprep.subr.bf16.mxu0 0
      %443 = vmatpush2.bf16.msra.mxu0 0
      %444 = vmatprep.subr.bf16.mxu0 0
      %445 = vmatpush2.bf16.msra.mxu0 0
      %446 = vmatprep.subr.bf16.mxu0 0
      %447 = vmatpush2.bf16.msra.mxu0 %v393
      %448 = vmatprep.mubr.bf16.mxu0 %v405
      %449 = vmatmul.mubr.bf16.gmra.mxu0 %v337
      %v450 = vpop.f32.mrf.mxu0
      %v451 = vadd.f32 0.0, %v450
      %v452 = vpop.f32.mrf.mxu0
      %v453 = vpop.f32.mrf.mxu0
      %v454 = vadd.f32 0.0, %v453
      %v455 = vpop.f32.mrf.mxu0
      %456 = vmatprep.mubr.bf16.mxu0 %v408
      %457 = vmatmul.mubr.bf16.gmra.mxu0 %v339
      %v458 = vpop.f32.mrf.mxu0
      %v459 = vadd.f32 0.0, %v458
      %v460 = vpop.f32.mrf.mxu0
      %v461 = vpop.f32.mrf.mxu0
      %v462 = vadd.f32 0.0, %v461
      %v463 = vpop.f32.mrf.mxu0
      %464 = vmatprep.mubr.bf16.mxu0 %v411
      %465 = vmatmul.mubr.bf16.gmra.mxu0 %v341
      %v466 = vpop.f32.mrf.mxu0
      %v467 = vadd.f32 0.0, %v466
      %v468 = vpop.f32.mrf.mxu0
      %v469 = vpop.f32.mrf.mxu0
      %v470 = vadd.f32 0.0, %v469
      %v471 = vpop.f32.mrf.mxu0
      %472 = vmatprep.mubr.bf16.mxu0 %v414
      %473 = vmatmul.mubr.bf16.gmra.mxu0 %v343
      %v474 = vpop.f32.mrf.mxu0
      %v475 = vadd.f32 0.0, %v474
      %v476 = vpop.f32.mrf.mxu0
      %v477 = vpop.f32.mrf.mxu0
      %v478 = vadd.f32 0.0, %v477
      %v479 = vpop.f32.mrf.mxu0
      %480 = vdwg.mxu0
      %v481 = vld [vmem:[%s2] sm:$0x1]
      %v483 = vlaneseq
      %v484 = vshrl.u32 %v483, 7
      %v485 = vsub.s32 0, %v484
      %v486 = vrot.slane %v481, %v485
      %v488 = vmul.f32 %v451, %v486
      %v489 = vmul.f32 %v454, %v486
      %v490 = vmul.f32 %v459, %v486
      %v491 = vmul.f32 %v462, %v486
      %v492 = vmul.f32 %v467, %v486
      %v493 = vmul.f32 %v470, %v486
      %v494 = vmul.f32 %v475, %v486
      %v495 = vmul.f32 %v478, %v486
      %v496 = vld [vmem:[%s3] sm:$0x1]
      %v498 = vlaneseq
      %v499 = vshrl.u32 %v498, 7
      %v500 = vsub.s32 0, %v499
      %v501 = vrot.slane %v496, %v500
      %v503 = vadd.f32 %v488, %v501
      %v504 = vadd.f32 %v489, %v501
      %v505 = vadd.f32 %v490, %v501
      %v506 = vadd.f32 %v491, %v501
      %v507 = vadd.f32 %v492, %v501
      %v508 = vadd.f32 %v493, %v501
      %v509 = vadd.f32 %v494, %v501
      %v510 = vadd.f32 %v495, %v501
      %v511 = vmax.f32 %v503, 0.0
      %v512 = vmax.f32 %v504, 0.0
      %v513 = vmax.f32 %v505, 0.0
      %v514 = vmax.f32 %v506, 0.0
      %v515 = vmax.f32 %v507, 0.0
      %v516 = vmax.f32 %v508, 0.0
      %v517 = vmax.f32 %v509, 0.0
      %v518 = vmax.f32 %v510, 0.0
      %v519 = vld [vmem:[#allocation2] sm:$0x1]
      %v520 = vadd.f32 %v511, %v512
      %v521 = vadd.f32 %v520, %v513
      %v522 = vadd.f32 %v521, %v514
      %v523 = vadd.f32 %v522, %v515
      %v524 = vadd.f32 %v523, %v516
      %v525 = vadd.f32 %v524, %v517
      %v526 = vadd.f32 %v525, %v518
      %v527 = vrot.slane %v526, 4
      %v528 = vadd.f32 %v526, %v527
      %v529 = vrot.slane %v528, 2
      %v530 = vadd.f32 %v528, %v529
      %v531 = vrot.slane %v530, 1
      %v532 = vadd.f32 %v530, %v531
      %v533 = vadd.f32 %v519, %v532
      %534 = vst [vmem:[#allocation2] sm:$0x1] %v533
      // Predicated region
      $region49: #{birdclef23_forward.3} parent=43 // pred_check
        %p535 = pneg %p282
      $region50: #{birdclef23_forward.3} parent=43 // pred_check_branch
        %537 = sbr.rel (%p535) target = $region52
      $region51: #{birdclef23_forward.3} parent=43 // pred_region
        %v538 = vld [vmem:[#allocation2] sm:$0x1]
        %v539 = vmul.f32 %v538, 0.015625
        %v540 = vpack.c.bf16 %v539, %v539
        %v541 = vld [vmem:[%s4] sm:$0xff]
        %v542 = vld [vmem:[%s4 + $0x8] sm:$0xf]
        %v543 = vld [vmem:[%s4 + $0xc] sm:$0xff]
        %v544 = vld [vmem:[%s4 + $0x14] sm:$0xf]
        %v545 = vld [vmem:[%s4 + $0x18] sm:$0xff]
        %v546 = vld [vmem:[%s4 + $0x20] sm:$0xf]
        %v547 = vld [vmem:[%s4 + $0x24] sm:$0xff]
        %v548 = vld [vmem:[%s4 + $0x2c] sm:$0xf]
        %v549 = vld [vmem:[%s4 + $0x30] sm:$0xff]
        %v550 = vld [vmem:[%s4 + $0x38] sm:$0xf]
        %v551 = vld [vmem:[%s4 + $0x3c] sm:$0xff]
        %v552 = vld [vmem:[%s4 + $0x44] sm:$0xf]
        %v553 = vld [vmem:[%s4 + $0x48] sm:$0xff]
        %v554 = vld [vmem:[%s4 + $0x50] sm:$0xf]
        %v555 = vld [vmem:[%s4 + $0x54] sm:$0xff]
        %v556 = vld [vmem:[%s4 + $0x5c] sm:$0xf]
        %v557 = vld [vmem:[%s4 + $0x60] sm:$0xff]
        %v558 = vld [vmem:[%s4 + $0x68] sm:$0xf]
        %v559 = vld [vmem:[%s4 + $0x6c] sm:$0xff]
        %v560 = vld [vmem:[%s4 + $0x74] sm:$0xf]
        %v561 = vld [vmem:[%s4 + $0x78] sm:$0xff]
        %v562 = vld [vmem:[%s4 + $0x80] sm:$0xf]
        %v563 = vld [vmem:[%s4 + $0x84] sm:$0xff]
        %v564 = vld [vmem:[%s4 + $0x8c] sm:$0xf]
        %v565 = vld [vmem:[%s4 + $0x90] sm:$0xff]
        %v566 = vld [vmem:[%s4 + $0x98] sm:$0xf]
        %v567 = vld [vmem:[%s4 + $0x9c] sm:$0xff]
        %v568 = vld [vmem:[%s4 + $0xa4] sm:$0xf]
        %v569 = vld [vmem:[%s4 + $0xa8] sm:$0xff]
        %v570 = vld [vmem:[%s4 + $0xb0] sm:$0xf]
        %v571 = vld [vmem:[%s4 + $0xb4] sm:$0xff]
        %v572 = vld [vmem:[%s4 + $0xbc] sm:$0xf]
        %v573 = vld [vmem:[%s5] sm:$0x7]
        %v606 = vunpack.c.l.b16 %v541
        %v607 = vunpack.c.h.b16 %v541
        %v608 = vunpack.c.l.b16 %v542
        %v609 = vunpack.c.l.b16 %v543
        %v610 = vunpack.c.h.b16 %v543
        %v611 = vunpack.c.l.b16 %v544
        %v612 = vunpack.c.l.b16 %v545
        %v613 = vunpack.c.h.b16 %v545
        %v614 = vunpack.c.l.b16 %v546
        %v615 = vunpack.c.l.b16 %v547
        %v616 = vunpack.c.h.b16 %v547
        %v617 = vunpack.c.l.b16 %v548
        %v618 = vunpack.c.l.b16 %v549
        %v619 = vunpack.c.h.b16 %v549
        %v620 = vunpack.c.l.b16 %v550
        %v621 = vunpack.c.l.b16 %v551
        %v622 = vunpack.c.h.b16 %v551
        %v623 = vunpack.c.l.b16 %v552
        %v624 = vunpack.c.l.b16 %v553
        %v625 = vunpack.c.h.b16 %v553
        %v626 = vunpack.c.l.b16 %v554
        %v627 = vunpack.c.l.b16 %v555
        %v628 = vunpack.c.h.b16 %v555
        %v629 = vunpack.c.l.b16 %v556
        %v630 = vunpack.c.l.b16 %v557
        %v631 = vunpack.c.h.b16 %v557
        %v632 = vunpack.c.l.b16 %v558
        %v633 = vunpack.c.l.b16 %v559
        %v634 = vunpack.c.h.b16 %v559
        %v635 = vunpack.c.l.b16 %v560
        %v636 = vunpack.c.l.b16 %v561
        %v637 = vunpack.c.h.b16 %v561
        %v638 = vunpack.c.l.b16 %v562
        %v639 = vunpack.c.l.b16 %v563
        %v640 = vunpack.c.h.b16 %v563
        %v641 = vunpack.c.l.b16 %v564
        %v642 = vunpack.c.l.b16 %v565
        %v643 = vunpack.c.h.b16 %v565
        %v644 = vunpack.c.l.b16 %v566
        %v645 = vunpack.c.l.b16 %v567
        %v646 = vunpack.c.h.b16 %v567
        %v647 = vunpack.c.l.b16 %v568
        %v648 = vunpack.c.l.b16 %v569
        %v649 = vunpack.c.h.b16 %v569
        %v650 = vunpack.c.l.b16 %v570
        %v651 = vunpack.c.l.b16 %v571
        %v652 = vunpack.c.h.b16 %v571
        %v653 = vunpack.c.l.b16 %v572
        %v654 = vpack.c.b16 %v609, %v606
        %v655 = vpack.c.b16 %v610, %v607
        %v656 = vpack.c.b16 %v611, %v608
        %v657 = vpack.c.b16 %v615, %v612
        %v658 = vpack.c.b16 %v616, %v613
        %v659 = vpack.c.b16 %v617, %v614
        %v660 = vpack.c.b16 %v621, %v618
        %v661 = vpack.c.b16 %v622, %v619
        %v662 = vpack.c.b16 %v623, %v620
        %v663 = vpack.c.b16 %v627, %v624
        %v664 = vpack.c.b16 %v628, %v625
        %v665 = vpack.c.b16 %v629, %v626
        %v666 = vpack.c.b16 %v633, %v630
        %v667 = vpack.c.b16 %v634, %v631
        %v668 = vpack.c.b16 %v635, %v632
        %v669 = vpack.c.b16 %v639, %v636
        %v670 = vpack.c.b16 %v640, %v637
        %v671 = vpack.c.b16 %v641, %v638
        %v672 = vpack.c.b16 %v645, %v642
        %v673 = vpack.c.b16 %v646, %v643
        %v674 = vpack.c.b16 %v647, %v644
        %v675 = vpack.c.b16 %v651, %v648
        %v676 = vpack.c.b16 %v652, %v649
        %v677 = vpack.c.b16 %v653, %v650
        %v703 = vlaneseq
        %v704 = vshrl.u32 %v703, 7
        %v705 = vsub.s32 0, %v704
        %v706 = vrot.slane %v573, %v705
        %v707 = vlaneseq
        %v708 = vshrl.u32 %v707, 7
        %v709 = vsub.s32 1, %v708
        %v710 = vrot.slane %v573, %v709
        %v711 = vlaneseq
        %v712 = vshrl.u32 %v711, 7
        %v713 = vsub.s32 2, %v712
        %v714 = vrot.slane %v573, %v713
        %718 = vmatprep.subr.bf16.mxu0 %v676
        %719 = vmatpush1.bf16.msra.mxu0 %v675
        %720 = vmatprep.subr.bf16.mxu0 %v673
        %721 = vmatpush1.bf16.msra.mxu0 %v672
        %722 = vmatprep.subr.bf16.mxu0 %v670
        %723 = vmatpush1.bf16.msra.mxu0 %v669
        %724 = vmatprep.subr.bf16.mxu0 %v667
        %725 = vmatpush1.bf16.msra.mxu0 %v666
        %726 = vmatprep.subr.bf16.mxu0 %v664
        %727 = vmatpush1.bf16.msra.mxu0 %v663
        %728 = vmatprep.subr.bf16.mxu0 %v661
        %729 = vmatpush1.bf16.msra.mxu0 %v660
        %730 = vmatprep.subr.bf16.mxu0 %v658
        %731 = vmatpush1.bf16.msra.mxu0 %v657
        %732 = vmatprep.subr.bf16.mxu0 %v655
        %733 = vmatpush1.bf16.msra.mxu0 %v654
        %734 = vmatprep.subr.bf16.mxu0 0
        %735 = vmatpush2.bf16.msra.mxu0 0
        %736 = vmatprep.subr.bf16.mxu0 0
        %737 = vmatpush2.bf16.msra.mxu0 0
        %738 = vmatprep.subr.bf16.mxu0 0
        %739 = vmatpush2.bf16.msra.mxu0 0
        %740 = vmatprep.subr.bf16.mxu0 0
        %741 = vmatpush2.bf16.msra.mxu0 0
        %742 = vmatprep.subr.bf16.mxu0 0
        %743 = vmatpush2.bf16.msra.mxu0 0
        %744 = vmatprep.subr.bf16.mxu0 0
        %745 = vmatpush2.bf16.msra.mxu0 0
        %746 = vmatprep.subr.bf16.mxu0 0
        %747 = vmatpush2.bf16.msra.mxu0 0
        %748 = vmatprep.subr.bf16.mxu0 0
        %749 = vmatpush2.bf16.msra.mxu0 0
        %750 = vmatprep.mubr.bf16.mxu0 0
        %751 = vmatmul.mubr.bf16.gmra.mxu0 %v540
        %v752 = vpop.f32.mrf.mxu0
        %v753 = vadd.f32 %v706, %v752
        %v754 = vpop.f32.mrf.mxu0
        %v755 = vadd.f32 %v710, %v754
        %v756 = vpop.f32.mrf.mxu0
        %v757 = vpop.f32.mrf.mxu0
        %758 = vdwg.mxu0
        %759 = vmatprep.subr.bf16.mxu0 0
        %760 = vmatpush1.bf16.msra.mxu0 %v677
        %761 = vmatprep.subr.bf16.mxu0 0
        %762 = vmatpush1.bf16.msra.mxu0 %v674
        %763 = vmatprep.subr.bf16.mxu0 0
        %764 = vmatpush1.bf16.msra.mxu0 %v671
        %765 = vmatprep.subr.bf16.mxu0 0
        %766 = vmatpush1.bf16.msra.mxu0 %v668
        %767 = vmatprep.subr.bf16.mxu0 0
        %768 = vmatpush1.bf16.msra.mxu0 %v665
        %769 = vmatprep.subr.bf16.mxu0 0
        %770 = vmatpush1.bf16.msra.mxu0 %v662
        %771 = vmatprep.subr.bf16.mxu0 0
        %772 = vmatpush1.bf16.msra.mxu0 %v659
        %773 = vmatprep.subr.bf16.mxu0 0
        %774 = vmatpush1.bf16.msra.mxu0 %v656
        %775 = vmatprep.subr.bf16.mxu0 0
        %776 = vmatpush2.bf16.msra.mxu0 0
        %777 = vmatprep.subr.bf16.mxu0 0
        %778 = vmatpush2.bf16.msra.mxu0 0
        %779 = vmatprep.subr.bf16.mxu0 0
        %780 = vmatpush2.bf16.msra.mxu0 0
        %781 = vmatprep.subr.bf16.mxu0 0
        %782 = vmatpush2.bf16.msra.mxu0 0
        %783 = vmatprep.subr.bf16.mxu0 0
        %784 = vmatpush2.bf16.msra.mxu0 0
        %785 = vmatprep.subr.bf16.mxu0 0
        %786 = vmatpush2.bf16.msra.mxu0 0
        %787 = vmatprep.subr.bf16.mxu0 0
        %788 = vmatpush2.bf16.msra.mxu0 0
        %789 = vmatprep.subr.bf16.mxu0 0
        %790 = vmatpush2.bf16.msra.mxu0 0
        %791 = vmatprep.mubr.bf16.mxu0 0
        %792 = vmatmul.mubr.bf16.gmra.mxu0 %v540
        %v793 = vpop.f32.mrf.mxu0
        %v794 = vadd.f32 %v714, %v793
        %v795 = vpop.f32.mrf.mxu0
        %v796 = vpop.f32.mrf.mxu0
        %v797 = vpop.f32.mrf.mxu0
        %798 = vdwg.mxu0
        %v802 = vcombine.low %v753, %v755
        %v804 = vunpack.c.l.s4 1966171168
        %v805 = vunpack.c.0.s8 %v804
        %v806 = vlaneseq
        %v807 = vshrl.u32 %v806, 7
        %v808 = vsub.s32 %v805, %v807
        %v809 = vrot.slane %v802, %v808
        %v811 = vunpack.c.l.s4 1966171168
        %v812 = vunpack.c.0.s8 %v811
        %v813 = vlaneseq
        %v814 = vshrl.u32 %v813, 7
        %v815 = vsub.s32 %v812, %v814
        %v816 = vrot.slane %v794, %v815
        %v817 = vcombine.low %v809, %v816
        %v819 = vunpack.c.l.s4 1966171168
        %v820 = vunpack.c.0.s8 %v819
        %v821 = vlaneseq
        %v822 = vshrl.u32 %v821, 7
        %v823 = vsub.s32 %v820, %v822
        %v824 = vrot.slane %v817, %v823
        %v826 = vlaneseq
        %vm827 = vcmp.ge.s32.totalorder %v826, 0
        %vm828 = vcmp.lt.s32.totalorder %v826, 384
        %vm829 = vmand %vm827, %vm828
        %830 = vst.msk [vmem:[%s280] sm:$0x7] %vm829, %v824
      $region52: #{birdclef23_forward.3} parent=43 // pred_fallthru
        _
      %p831 = scmp.lt.s32.totalorder %s21, 1
      %s832 = scalar_select %p831, %s21, 1
      %s833 = smul.addr %s832, 3
      %s834 = scalar_lea.vmem %s6, %s833
      // Predicated region
      $region53: #{birdclef23_forward.3} parent=43 // pred_check
        %p835 = pneg %p180
      $region54: #{birdclef23_forward.3} parent=43 // pred_check_branch
        %837 = sbr.rel (%p835) target = $region56
      $region55: #{birdclef23_forward.3} parent=43 // pred_region
        _
      $region56: #{birdclef23_forward.3} parent=43 // pred_fallthru
        _
    $region44: #{birdclef23_forward.3} parent=5 // pred_fallthru
      _
    %p838 = scmp.le.s32.totalorder 2, %s12
    // Predicated region
    $region57: #{birdclef23_forward.3} parent=5 // pred_check
      %p839 = pneg %p838
    $region58: #{birdclef23_forward.3} parent=5 // pred_check_branch
      %841 = sbr.rel (%p839) target = $region60
    $region59: #{birdclef23_forward.3} parent=5 // pred_region
      %s842 = ssub.s32 %s12, 2
      // Predicated region
      $region61: #{birdclef23_forward.3} parent=59 // pred_check
        %p843 = pneg %p186
      $region62: #{birdclef23_forward.3} parent=59 // pred_check_branch
        %845 = sbr.rel (%p843) target = $region64
      $region63: #{birdclef23_forward.3} parent=59 // pred_region
        %p846 = scmp.lt.s32.totalorder %s23, 1
        %s847 = scalar_select %p846, %s23, 1
        %s848 = smul.addr %s847, 3
        %s849 = scalar_lea.vmem %s6, %s848
      $region64: #{birdclef23_forward.3} parent=59 // pred_fallthru
        _
    $region60: #{birdclef23_forward.3} parent=5 // pred_fallthru
      _
  $region6: #{birdclef23_forward.3} parent=0 // loop_footer
    %s16 = sadd.s32 1, %s12
  $region7: #{birdclef23_forward.3} parent=0 // loop_footer_branch
    %11 = sbr.rel target = $region3
  $region8: #{birdclef23_forward.3} parent=0 // loop_exit
    _

</llo_original>
